<compile_context>
chip_gen: v7x
topology: tpu7x:2x2x1
jax: 0.10.0
libtpu: 0.0.40
codegen_flags: <defaults>
</compile_context>

<pallas_src>
import math

import jax
import jax.numpy as jnp
from jax.experimental import pallas as pl
from jax.experimental.pallas import tpu as pltpu


def _round_up(v: int, m: int) -> int:
    return -(-v // m) * m


def _spiral_enblock_kernel(a_ref, w_ref, o_ref):
    # a_ref: (TR, K_pad)        bf16  pooled+gathered spiral features (+ rowsum col)
    # w_ref: (K_pad, Cout_pad)  bf16  transposed linear weight (+ bias row)
    # o_ref: (TR, Cout_pad)     f32   pooled output rows (lane-dense, 128-aligned)
    o_ref[...] = jnp.dot(a_ref[...], w_ref[...],
                         preferred_element_type=jnp.float32)


def spiral_enblock_forward(x, spiral_idx, weight, bias, pool_cols, pool_vals,
                           *, row_tile=256):
    """x: (B, N, Cin) f32; spiral_idx: (N, S) int32; weight: (Cout, S*Cin);
    bias: (Cout,); pool_cols/pool_vals: (M, nnz) row-grouped COO of the sparse
    (M, N) down_transform.  Returns (B, M, Cout) f32."""
    B, N, Cin = x.shape
    N_idx, S = spiral_idx.shape
    assert N_idx == N
    Cout, K = weight.shape
    assert K == S * Cin
    M, nnz = pool_cols.shape
    assert pool_vals.shape == (M, nnz)

    # ---- JAX glue: spiral gather fused with the sparse pooling --------------
    # Pool commutes with the per-vertex Linear, so gather/pool only the M output
    # vertices:  pre[b, m, s*Cin + c] = sum_j val[m,j] * x[b, idx[col[m,j], s], c]
    # TODO(synk): the (static-index) row gather itself has no clean in-kernel
    # Pallas TPU equivalent; it is done here in plain JAX on an M-sized slab.
    comb_idx = spiral_idx[pool_cols.reshape(-1)]                  # (M*nnz, S)
    g = x[:, comb_idx.reshape(-1), :]                             # (B, M*nnz*S, Cin)
    g = g.reshape(B, M, nnz, S, Cin)
    pre = jnp.einsum("bmjsc,mj->bmsc", g, pool_vals)              # (B, M, S, Cin)
    pre = pre.reshape(B, M, K)
    row_sum = jnp.sum(pool_vals, axis=1)                          # (M,) bias scale

    # ---- pack lane-aligned bf16 operands -------------------------------------
    K_pad = _round_up(K + 1, 128)        # +1 column carries the pooling row-sum
    Cout_pad = _round_up(Cout, 128)      # lane-dense output stores
    rows = B * M

    # Row tile: multiple of 8 sublanes; keep >=2 grid steps when possible so the
    # two v7x TensorCores both get work (neutral on single-TC v5e/v6e).
    tr = _round_up(min(row_tile, _round_up(rows, 8)), 8)
    if rows > 8 and _round_up(rows, tr) // tr < 2:
        tr = _round_up(-(-rows // 2), 8)
    rows_pad = _round_up(rows, tr)

    a = jnp.zeros((rows_pad, K_pad), dtype=jnp.bfloat16)
    a = a.at[:rows, :K].set(pre.reshape(rows, K).astype(jnp.bfloat16))
    a = a.at[:rows, K].set(jnp.tile(row_sum, B).astype(jnp.bfloat16))

    w = jnp.zeros((K_pad, Cout_pad), dtype=jnp.bfloat16)
    w = w.at[:K, :Cout].set(weight.T.astype(jnp.bfloat16))
    w = w.at[K, :Cout].set(bias.astype(jnp.bfloat16))             # bias-after-pool row

    out = pl.pallas_call(
        _spiral_enblock_kernel,
        out_shape=jax.ShapeDtypeStruct((rows_pad, Cout_pad), jnp.float32),
        grid_spec=pltpu.PrefetchScalarGridSpec(
            num_scalar_prefetch=0,
            grid=(rows_pad // tr,),
            in_specs=[
                pl.BlockSpec((tr, K_pad), lambda r: (r, 0)),
                pl.BlockSpec((K_pad, Cout_pad), lambda r: (0, 0)),  # VMEM-resident
            ],
            out_specs=pl.BlockSpec((tr, Cout_pad), lambda r: (r, 0)),
        ),
        compiler_params=pltpu.CompilerParams(
            dimension_semantics=("parallel",),
        ),
    )(a, w)

    return out[:rows, :Cout].reshape(B, M, Cout)


def _xavier_uniform(key, shape, dtype=jnp.float32):
    fan_out, fan_in = shape
    limit = math.sqrt(6.0 / (fan_in + fan_out))
    return jax.random.uniform(key, shape, dtype, minval=-limit, maxval=limit)


if __name__ == "__main__":
    # Small, deterministic synthetic setup.
    B, N, Cin = 2, 16, 4      # batch, vertices, input channels
    S = 9                     # spiral sequence length
    Cout = 32                 # output channels
    M = 8                     # downsampled vertex count
    NNZ = 2                   # nonzeros per down_transform row

    key = jax.random.PRNGKey(0)
    k_x, k_idx, k_w, k_col = jax.random.split(key, 4)

    x = jax.random.normal(k_x, (B, N, Cin), dtype=jnp.float32)
    spiral_idx = jax.random.randint(k_idx, (N, S), 0, N, dtype=jnp.int32)

    # SpiralConv parameters: Linear(S*Cin -> Cout), xavier_uniform weight, zero bias.
    weight = _xavier_uniform(k_w, (Cout, S * Cin))
    bias = jnp.zeros((Cout,), dtype=jnp.float32)

    # down_transform: sparse (M, N) with NNZ nonzeros (0.5 each) per row,
    # stored row-grouped (cols / vals per output row) instead of densified.
    pool_cols = jax.random.randint(k_col, (M, NNZ), 0, N, dtype=jnp.int32)
    pool_vals = jnp.full((M, NNZ), 0.5, dtype=jnp.float32)

    fwd = jax.jit(spiral_enblock_forward)
    out = jax.block_until_ready(fwd(x, spiral_idx, weight, bias, pool_cols, pool_vals))
    assert out.shape == (B, M, Cout)

    # Reference: literal f32 translation of the PyTorch module
    # (spiral gather -> flatten -> Linear -> sparse Pool).
    gathered = x[:, spiral_idx.reshape(-1), :].reshape(B, N, S * Cin)
    conv_ref = gathered @ weight.T + bias[None, None, :]
    rows_coo = jnp.repeat(jnp.arange(M, dtype=jnp.int32), NNZ)
    cols_coo = pool_cols.reshape(-1)
    vals_coo = pool_vals.reshape(-1)
    ref = jnp.zeros((B, M, Cout), jnp.float32).at[:, rows_coo, :].add(
        vals_coo[None, :, None] * conv_ref[:, cols_coo, :])

    assert jnp.allclose(out, ref, atol=5e-2, rtol=5e-2), (
        float(jnp.max(jnp.abs(out - ref))))

    print("KERNEL_OK")
</pallas_src>

<mosaic_0001>
module attributes {stable_mosaic.version = 11 : i64} {
  func.func @_spiral_enblock_kernel(%arg0: i32, %arg1: memref<8x128xbf16, #tpu.memory_space<vmem>>, %arg2: memref<128x128xbf16, #tpu.memory_space<vmem>>, %arg3: memref<8x128xf32, #tpu.memory_space<vmem>>) attributes {dimension_semantics = [#tpu.dimension_semantics<parallel>], iteration_bounds = array<i64: 2>, scalar_prefetch = 0 : i64, scratch_operands = 0 : i64, tpu.core_type = #tpu.core_type<tc>, window_params = [{transform_indices = @transform_0, window_bounds = array<i64: 8, 128>}, {pipeline_mode = #tpu.pipeline_mode<synchronous>, transform_indices = @transform_1, window_bounds = array<i64: 128, 128>}, {transform_indices = @transform_2, window_bounds = array<i64: 8, 128>}]} {
    %c0 = arith.constant 0 : index
    %c0_0 = arith.constant 0 : index
    %0 = vector.load %arg1[%c0, %c0_0] : memref<8x128xbf16, #tpu.memory_space<vmem>>, vector<8x128xbf16>
    %c0_1 = arith.constant 0 : index
    %c0_2 = arith.constant 0 : index
    %1 = vector.load %arg2[%c0_1, %c0_2] : memref<128x128xbf16, #tpu.memory_space<vmem>>, vector<128x128xbf16>
    %cst = arith.constant dense<0.000000e+00> : vector<8x128xf32>
    %2 = tpu.matmul %0, %1, %cst {dimension_numbers = #tpu.dot_dimension_numbers<[1], [0], [0], [1], [0, 0, 1, 1], [], []>} : vector<8x128xbf16>, vector<128x128xbf16>, vector<8x128xf32> -> vector<8x128xf32>
    %c0_3 = arith.constant 0 : index
    %c0_4 = arith.constant 0 : index
    %3 = vector.load %arg3[%c0_3, %c0_4] : memref<8x128xf32, #tpu.memory_space<vmem>>, vector<8x128xf32>
    tpu.vector_store %arg3[%c0_3, %c0_4], %2 {strides = array<i32>} : memref<8x128xf32, #tpu.memory_space<vmem>>, vector<8x128xf32>,
    return
  }
  func.func @transform_0(%arg0: i32) -> (i32, i32) {
    %c0_i32 = arith.constant 0 : i32
    %c0_i32_0 = arith.constant 0 : i32
    return %arg0, %c0_i32 : i32, i32
  }
  func.func @transform_1(%arg0: i32) -> (i32, i32) {
    %c0_i32 = arith.constant 0 : i32
    %c0_i32_0 = arith.constant 0 : i32
    %c0_i32_1 = arith.constant 0 : i32
    return %c0_i32, %c0_i32_0 : i32, i32
  }
  func.func @transform_2(%arg0: i32) -> (i32, i32) {
    %c0_i32 = arith.constant 0 : i32
    %c0_i32_0 = arith.constant 0 : i32
    return %arg0, %c0_i32 : i32, i32
  }
}

</mosaic_0001>

<llo_original>
// kernel: spiral_enblock_forward.1
$region0: #{spiral_enblock_forward.1}
  #allocation0 [shape = 'u32[]', space=smem, size = 0x4, offset = 0x4, fixed_abs, tag = 'smem constant byte address 0x4 - core index']
  #allocation1 [shape = 'u32[144,128]{1,0:T(1,128)}', space=vmem, size = 0x12000, scoped, tag = 'internal scratch']
  %s0 = inlined_call_operand.vmem [shape: bf16[16,128], index: 0, kind: input, shape index: {}]
  %s1 = inlined_call_operand.vmem [shape: bf16[128,128], index: 1, kind: input, shape index: {}]
  %s2 = inlined_call_operand.vmem [shape: f32[16,128], index: 2, kind: output, shape index: {}]
  %s3 = sld [smem:[#allocation0]]
  $region41: #{spiral_enblock_forward.1} parent=0
    _
  %s5 = ssub.s32 1, %s3
  %s6 = scalar_select 0, %s5, %s3
  loop: start=0, step=1, limit=4
  $region2: #{spiral_enblock_forward.1} parent=0 // loop_pre_header
    _
  $region3: #{spiral_enblock_forward.1} parent=0 // loop_header
    %s8 = sphi 0, %s12
    %p9 = scmp.ge.s32.totalorder %s8, 4
    %s18 = sphi 0, %s20
    %s21 = sphi 0, %s18
    %s22 = sphi 0, %s21
    %s38 = sphi 0, %s22
    %s42 = sphi 0, %s42
    %s44 = sphi 0, %s42
    %s45 = sphi 0, %s44
    %s59 = sphi 0, %s45
    %s65 = sphi 0, %s67
    %s68 = sphi 0, %s65
    %s69 = sphi 0, %s68
    %s85 = sphi 0, %s69
  $region4: #{spiral_enblock_forward.1} parent=0 // loop_header_branch
    %11 = sbr.rel (%p9) target = $region8
  $region5: #{spiral_enblock_forward.1} parent=0 // loop_body
    %s13 = ssub.s32 %s8, 1
    %s14 = ssub.s32 %s8, 2
    %s15 = sadd.s32 %s8, 1
    %s16 = ssub.s32 %s8, %s15
    %p17 = scmp.eq.s32.totalorder %s16, 0
    %s19 = sadd.s32 %s18, 1
    %s20 = scalar_select %p17, %s18, %s19
    %p23 = pneg %p17
    %p24 = scmp.eq.s32.totalorder %s8, 1
    %p25 = por %p23, %p24
    %p26 = scmp.ne.s32.totalorder %s18, %s21
    %p27 = scmp.eq.s32.totalorder %s8, 0
    %p28 = por %p26, %p27
    %p29 = scmp.ne.s32.totalorder %s18, %s21
    %p30 = scmp.eq.s32.totalorder %s13, 1
    %p31 = por %p29, %p30
    %p32 = scmp.ne.s32.totalorder %s21, %s22
    %p33 = scmp.eq.s32.totalorder %s13, 0
    %p34 = por %p32, %p33
    %p35 = scmp.ne.s32.totalorder %s21, %s22
    %p36 = scmp.eq.s32.totalorder %s14, 1
    %p37 = por %p35, %p36
    %p39 = scmp.ne.s32.totalorder %s22, %s38
    %p40 = scmp.eq.s32.totalorder %s14, 0
    %p41 = por %p39, %p40
    %s43 = sadd.s32 %s42, 1
    %p46 = scmp.eq.s32.totalorder %s8, 1
    %p47 = scmp.ne.s32.totalorder %s42, %s44
    %p48 = scmp.eq.s32.totalorder %s8, 0
    %p49 = por %p47, %p48
    %p50 = scmp.ne.s32.totalorder %s42, %s44
    %p51 = scmp.eq.s32.totalorder %s13, 1
    %p52 = por %p50, %p51
    %p53 = scmp.ne.s32.totalorder %s44, %s45
    %p54 = scmp.eq.s32.totalorder %s13, 0
    %p55 = por %p53, %p54
    %p56 = scmp.ne.s32.totalorder %s44, %s45
    %p57 = scmp.eq.s32.totalorder %s14, 1
    %p58 = por %p56, %p57
    %p60 = scmp.ne.s32.totalorder %s45, %s59
    %p61 = scmp.eq.s32.totalorder %s14, 0
    %p62 = por %p60, %p61
    %s63 = ssub.s32 %s8, %s15
    %p64 = scmp.eq.s32.totalorder %s63, 0
    %s66 = sadd.s32 %s65, 1
    %s67 = scalar_select %p64, %s65, %s66
    %p70 = pneg %p64
    %p71 = scmp.eq.s32.totalorder %s8, 1
    %p72 = por %p70, %p71
    %p73 = scmp.ne.s32.totalorder %s65, %s68
    %p74 = scmp.eq.s32.totalorder %s8, 0
    %p75 = por %p73, %p74
    %p76 = scmp.ne.s32.totalorder %s65, %s68
    %p77 = scmp.eq.s32.totalorder %s13, 1
    %p78 = por %p76, %p77
    %p79 = scmp.ne.s32.totalorder %s68, %s69
    %p80 = scmp.eq.s32.totalorder %s13, 0
    %p81 = por %p79, %p80
    %p82 = scmp.ne.s32.totalorder %s68, %s69
    %p83 = scmp.eq.s32.totalorder %s14, 1
    %p84 = por %p82, %p83
    %p86 = scmp.ne.s32.totalorder %s69, %s85
    %p87 = scmp.eq.s32.totalorder %s14, 0
    %p88 = por %p86, %p87
    %p89 = scmp.le.s32.totalorder 1, %s8
    %p90 = scmp.lt.s32.totalorder %s8, 3
    %p91 = pnand %p89, %p90
    %p92 = pneg %p91
    // Predicated region
    $region9: #{spiral_enblock_forward.1} parent=5 // pred_check
      _
    $region10: #{spiral_enblock_forward.1} parent=5 // pred_check_branch
      %94 = sbr.rel (%p91) target = $region12
    $region11: #{spiral_enblock_forward.1} parent=5 // pred_region
      %s95 = ssub.s32 %s8, 1
      // Predicated region
      $region13: #{spiral_enblock_forward.1} parent=11 // pred_check
        %p96 = pneg %p55
      $region14: #{spiral_enblock_forward.1} parent=11 // pred_check_branch
        %98 = sbr.rel (%p96) target = $region16
      $region15: #{spiral_enblock_forward.1} parent=11 // pred_region
        _
      $region16: #{spiral_enblock_forward.1} parent=11 // pred_fallthru
        _
    $region12: #{spiral_enblock_forward.1} parent=5 // pred_fallthru
      _
    %p99 = scmp.lt.s32.totalorder %s8, 2
    // Predicated region
    $region17: #{spiral_enblock_forward.1} parent=5 // pred_check
      %p100 = pneg %p99
    $region18: #{spiral_enblock_forward.1} parent=5 // pred_check_branch
      %102 = sbr.rel (%p100) target = $region20
    $region19: #{spiral_enblock_forward.1} parent=5 // pred_region
      // Predicated region
      $region21: #{spiral_enblock_forward.1} parent=19 // pred_check
        %p103 = pneg %p28
      $region22: #{spiral_enblock_forward.1} parent=19 // pred_check_branch
        %105 = sbr.rel (%p103) target = $region24
      $region23: #{spiral_enblock_forward.1} parent=19 // pred_region
        %p106 = scmp.lt.s32.totalorder %s8, 1
        %s107 = scalar_select %p106, %s8, 1
        %s108 = smul.addr %s107, 4
        %s109 = scalar_lea.vmem %s0, %s108
      $region24: #{spiral_enblock_forward.1} parent=19 // pred_fallthru
        _
    $region20: #{spiral_enblock_forward.1} parent=5 // pred_fallthru
      _
    %p110 = scmp.le.s32.totalorder 1, %s8
    %p111 = scmp.lt.s32.totalorder %s8, 3
    %p112 = pnand %p110, %p111
    %p113 = pneg %p112
    // Predicated region
    $region25: #{spiral_enblock_forward.1} parent=5 // pred_check
      _
    $region26: #{spiral_enblock_forward.1} parent=5 // pred_check_branch
      %115 = sbr.rel (%p112) target = $region28
    $region27: #{spiral_enblock_forward.1} parent=5 // pred_region
      %s116 = ssub.s32 %s8, 1
      %p117 = scmp.lt.s32.totalorder %s13, 1
      %s118 = scalar_select %p117, %s13, 1
      %s119 = smul.addr %s118, 4
      %s120 = scalar_lea.vmem %s0, %s119
      %p121 = pneg %p34
      %p122 = pneg %p31
      %p123 = pneg %p55
      %p124 = pneg %p52
      %p125 = pneg %p81
      %p126 = pneg %p78
      %p127 = scmp.lt.s32.totalorder %s13, 1
      %s128 = scalar_select %p127, %s13, 1
      %s129 = smul.addr %s128, 8
      %s130 = scalar_lea.vmem %s2, %s129
      %p131 = scmp.lt.s32.totalorder %s13, 1
      %s132 = scalar_select %p131, %s13, 1
      %s133 = smul.addr %s132, 4
      %s134 = scalar_lea.vmem %s0, %s133
      %p135 = scmp.lt.s32.totalorder %s13, 1
      %s136 = scalar_select %p135, %s13, 1
      %s137 = smul.addr %s136, 8
      %s138 = scalar_lea.vmem %s2, %s137
      %v140 = vld [vmem:[%s134] sm:$0xf]
      %v141 = vld [vmem:[%s1] sm:$0xf]
      %v142 = vld [vmem:[%s1 + $0x4] sm:$0xf]
      %v143 = vld [vmem:[%s1 + $0x8] sm:$0xf]
      %v144 = vld [vmem:[%s1 + $0xc] sm:$0xf]
      %v145 = vld [vmem:[%s1 + $0x10] sm:$0xf]
      %v146 = vld [vmem:[%s1 + $0x14] sm:$0xf]
      %v147 = vld [vmem:[%s1 + $0x18] sm:$0xf]
      %v148 = vld [vmem:[%s1 + $0x1c] sm:$0xf]
      %v149 = vld [vmem:[%s1 + $0x20] sm:$0xf]
      %v150 = vld [vmem:[%s1 + $0x24] sm:$0xf]
      %v151 = vld [vmem:[%s1 + $0x28] sm:$0xf]
      %v152 = vld [vmem:[%s1 + $0x2c] sm:$0xf]
      %v153 = vld [vmem:[%s1 + $0x30] sm:$0xf]
      %v154 = vld [vmem:[%s1 + $0x34] sm:$0xf]
      %v155 = vld [vmem:[%s1 + $0x38] sm:$0xf]
      %v156 = vld [vmem:[%s1 + $0x3c] sm:$0xf]
      %v173 = vunpack.c.l.b16 %v141
      %v174 = vunpack.c.l.b16 %v142
      %v175 = vunpack.c.l.b16 %v143
      %v176 = vunpack.c.l.b16 %v144
      %v177 = vunpack.c.l.b16 %v145
      %v178 = vunpack.c.l.b16 %v146
      %v179 = vunpack.c.l.b16 %v147
      %v180 = vunpack.c.l.b16 %v148
      %v181 = vunpack.c.l.b16 %v149
      %v182 = vunpack.c.l.b16 %v150
      %v183 = vunpack.c.l.b16 %v151
      %v184 = vunpack.c.l.b16 %v152
      %v185 = vunpack.c.l.b16 %v153
      %v186 = vunpack.c.l.b16 %v154
      %v187 = vunpack.c.l.b16 %v155
      %v188 = vunpack.c.l.b16 %v156
      %v189 = vpack.c.b16 %v174, %v173
      %v190 = vpack.c.b16 %v176, %v175
      %v191 = vpack.c.b16 %v178, %v177
      %v192 = vpack.c.b16 %v180, %v179
      %v193 = vpack.c.b16 %v182, %v181
      %v194 = vpack.c.b16 %v184, %v183
      %v195 = vpack.c.b16 %v186, %v185
      %v196 = vpack.c.b16 %v188, %v187
      %205 = vmatprep.subr.bf16.mxu0 0
      %206 = vmatpush1.bf16.msra.mxu0 %v189
      %207 = vmatprep.subr.bf16.mxu0 0
      %208 = vmatpush1.bf16.msra.mxu0 %v190
      %209 = vmatprep.subr.bf16.mxu0 0
      %210 = vmatpush1.bf16.msra.mxu0 %v191
      %211 = vmatprep.subr.bf16.mxu0 0
      %212 = vmatpush1.bf16.msra.mxu0 %v192
      %213 = vmatprep.subr.bf16.mxu0 0
      %214 = vmatpush1.bf16.msra.mxu0 %v193
      %215 = vmatprep.subr.bf16.mxu0 0
      %216 = vmatpush1.bf16.msra.mxu0 %v194
      %217 = vmatprep.subr.bf16.mxu0 0
      %218 = vmatpush1.bf16.msra.mxu0 %v195
      %219 = vmatprep.subr.bf16.mxu0 0
      %220 = vmatpush1.bf16.msra.mxu0 %v196
      %221 = vmatprep.subr.bf16.mxu0 0
      %222 = vmatpush1.bf16.msra.mxu0 0
      %223 = vmatprep.subr.bf16.mxu0 0
      %224 = vmatpush1.bf16.msra.mxu0 0
      %225 = vmatprep.subr.bf16.mxu0 0
      %226 = vmatpush1.bf16.msra.mxu0 0
      %227 = vmatprep.subr.bf16.mxu0 0
      %228 = vmatpush1.bf16.msra.mxu0 0
      %229 = vmatprep.subr.bf16.mxu0 0
      %230 = vmatpush1.bf16.msra.mxu0 0
      %231 = vmatprep.subr.bf16.mxu0 0
      %232 = vmatpush1.bf16.msra.mxu0 0
      %233 = vmatprep.subr.bf16.mxu0 0
      %234 = vmatpush1.bf16.msra.mxu0 0
      %235 = vmatprep.subr.bf16.mxu0 0
      %236 = vmatpush1.bf16.msra.mxu0 0
      %237 = vmatprep.mubr.bf16.mxu0 0
      %238 = vmatmul.mubr.bf16.gmra.mrb[0].mxu0 %v140
      %v239 = vpop.f32.mrb[0].mxu0
      %v240 = vadd.f32 0.0, %v239
      %v241 = vpop.f32.mrb[0].mxu0
      %v242 = vpop.f32.mrb[0].mxu0
      %v243 = vpop.f32.mrb[0].mxu0
      %244 = vdwg.mxu0
      %245 = vst [vmem:[%s138] sm:$0xff] %v240
      %p246 = scmp.lt.s32.totalorder %s13, 1
      %s247 = scalar_select %p246, %s13, 1
      %s248 = smul.addr %s247, 8
      %s249 = scalar_lea.vmem %s2, %s248
      // Predicated region
      $region29: #{spiral_enblock_forward.1} parent=27 // pred_check
        %p250 = pneg %p78
      $region30: #{spiral_enblock_forward.1} parent=27 // pred_check_branch
        %252 = sbr.rel (%p250) target = $region32
      $region31: #{spiral_enblock_forward.1} parent=27 // pred_region
        _
      $region32: #{spiral_enblock_forward.1} parent=27 // pred_fallthru
        _
    $region28: #{spiral_enblock_forward.1} parent=5 // pred_fallthru
      _
    %p253 = scmp.le.s32.totalorder 2, %s8
    // Predicated region
    $region33: #{spiral_enblock_forward.1} parent=5 // pred_check
      %p254 = pneg %p253
    $region34: #{spiral_enblock_forward.1} parent=5 // pred_check_branch
      %256 = sbr.rel (%p254) target = $region36
    $region35: #{spiral_enblock_forward.1} parent=5 // pred_region
      %s257 = ssub.s32 %s8, 2
      // Predicated region
      $region37: #{spiral_enblock_forward.1} parent=35 // pred_check
        %p258 = pneg %p84
      $region38: #{spiral_enblock_forward.1} parent=35 // pred_check_branch
        %260 = sbr.rel (%p258) target = $region40
      $region39: #{spiral_enblock_forward.1} parent=35 // pred_region
        %p261 = scmp.lt.s32.totalorder %s14, 1
        %s262 = scalar_select %p261, %s14, 1
        %s263 = smul.addr %s262, 8
        %s264 = scalar_lea.vmem %s2, %s263
      $region40: #{spiral_enblock_forward.1} parent=35 // pred_fallthru
        _
    $region36: #{spiral_enblock_forward.1} parent=5 // pred_fallthru
      _
  $region6: #{spiral_enblock_forward.1} parent=0 // loop_footer
    %s12 = sadd.s32 1, %s8
  $region7: #{spiral_enblock_forward.1} parent=0 // loop_footer_branch
    %7 = sbr.rel target = $region3
  $region8: #{spiral_enblock_forward.1} parent=0 // loop_exit
    _

</llo_original>
